<compile_context>
chip_gen: v7x
topology: tpu7x:2x2x1
jax: 0.10.0
libtpu: 0.0.40
codegen_flags: <defaults>
</compile_context>

<pallas_src>
import math

import jax
import jax.numpy as jnp
import numpy as np
from jax.experimental import pallas as pl
from jax.experimental.pallas import tpu as pltpu


def _erf(x):
    """Abramowitz & Stegun 7.1.26 rational approximation, |err| <= 1.5e-7."""
    p = jnp.float32(0.3275911)
    a1 = jnp.float32(0.254829592)
    a2 = jnp.float32(-0.284496736)
    a3 = jnp.float32(1.421413741)
    a4 = jnp.float32(-1.453152027)
    a5 = jnp.float32(1.061405429)
    ax = jnp.abs(x)
    t = 1.0 / (1.0 + p * ax)
    poly = ((((a5 * t + a4) * t + a3) * t + a2) * t + a1) * t
    y = 1.0 - poly * jnp.exp(-(ax * ax))
    return jnp.where(x >= 0, y, -y)


def _gelu_exact(x):
    # torch nn.GELU() default: 0.5 * x * (1 + erf(x / sqrt(2)))
    return 0.5 * x * (1.0 + _erf(x * jnp.float32(1.0 / math.sqrt(2.0))))


def sap_kernel(hidden_ref, starts_ref, ends_ref,
               w_att_ref, b_att_ref, w_proj_ref, b_proj_ref,
               gamma_ref, beta_ref, out_ref):
    hidden = hidden_ref[0]                     # (T, Dh) f32
    starts = starts_ref[0]                     # (N, 1)  int32
    ends = ends_ref[0]                         # (N, 1)  int32
    n_spans, seq_len = starts.shape[0], hidden.shape[0]

    # --- global attention logits over tokens: (1, T) -------------------------
    # contract the hidden dim of both operands -> MXU, no explicit transpose
    logits = jax.lax.dot_general(
        w_att_ref[...], hidden,
        dimension_numbers=(((1,), (1,)), ((), ())),
        preferred_element_type=jnp.float32) + b_att_ref[...]       # (1,1) bcast

    # --- per-span token membership mask (tokens on the lane axis) ------------
    t_idx = jax.lax.broadcasted_iota(jnp.int32, (n_spans, seq_len), 1)
    in_span = (t_idx >= starts) & (t_idx <= ends)                   # (N, T)

    # --- masked, numerically stable softmax over the tokens of each span -----
    masked = jnp.where(in_span, logits, jnp.float32(-1e30))         # (N, T)
    m = jnp.max(masked, axis=-1, keepdims=True)
    e = jnp.where(in_span, jnp.exp(masked - m), 0.0)
    denom = jnp.sum(e, axis=-1, keepdims=True)
    weights = e * pl.reciprocal(denom, approx=False)                # (N, T)

    # --- attention-weighted span representation (one MXU matmul) -------------
    span_rep = jnp.dot(weights, hidden,
                       preferred_element_type=jnp.float32)          # (N, Dh)

    # --- GELU -> projection (MXU) -> LayerNorm(eps=1e-12) --------------------
    act = _gelu_exact(span_rep)
    proj = jnp.dot(act, w_proj_ref[...],
                   preferred_element_type=jnp.float32) + b_proj_ref[...]  # (N, De)

    mean = jnp.mean(proj, axis=-1, keepdims=True)
    ctr = proj - mean
    var = jnp.mean(ctr * ctr, axis=-1, keepdims=True)
    inv = jax.lax.rsqrt(var + jnp.float32(1e-12))
    out_ref[0] = ctr * inv * gamma_ref[...] + beta_ref[...]


def self_attentive_pooling(hidden_state, span_indices, params):
    """hidden_state: (B, T, Dh) f32; span_indices: (B, N, 2) int32 inclusive spans."""
    w_att, b_att, w_proj, b_proj, gamma, beta = params
    B, T, Dh = hidden_state.shape
    N = span_indices.shape[1]
    De = w_proj.shape[1]

    starts = span_indices[..., 0:1].astype(jnp.int32)   # (B, N, 1)
    ends = span_indices[..., 1:2].astype(jnp.int32)     # (B, N, 1)

    grid_spec = pltpu.PrefetchScalarGridSpec(
        num_scalar_prefetch=0,
        grid=(B,),
        in_specs=[
            pl.BlockSpec((1, T, Dh), lambda b: (b, 0, 0)),   # hidden_state
            pl.BlockSpec((1, N, 1), lambda b: (b, 0, 0)),    # span starts
            pl.BlockSpec((1, N, 1), lambda b: (b, 0, 0)),    # span ends
            pl.BlockSpec((1, Dh), lambda b: (0, 0)),         # w_att
            pl.BlockSpec((1, 1), lambda b: (0, 0)),          # b_att
            pl.BlockSpec((Dh, De), lambda b: (0, 0)),        # w_proj
            pl.BlockSpec((1, De), lambda b: (0, 0)),         # b_proj
            pl.BlockSpec((1, De), lambda b: (0, 0)),         # ln gamma
            pl.BlockSpec((1, De), lambda b: (0, 0)),         # ln beta
        ],
        out_specs=pl.BlockSpec((1, N, De), lambda b: (b, 0, 0)),
    )
    return pl.pallas_call(
        sap_kernel,
        out_shape=jax.ShapeDtypeStruct((B, N, De), jnp.float32),
        grid_spec=grid_spec,
        compiler_params=pltpu.CompilerParams(
            dimension_semantics=("parallel",)),
    )(hidden_state, starts, ends, w_att, b_att, w_proj, b_proj, gamma, beta)


def _reference(hidden_state, span_indices, params):
    """Pure-JAX reference mirroring torch SelfAttentivePooling with AllenNLP's
    SelfAttentiveSpanExtractor (gather-based batched_span_select + masked_softmax),
    exact erf GELU, Linear, LayerNorm(eps=1e-12)."""
    w_att, b_att, w_proj, b_proj, gamma, beta = params
    B, T, Dh = hidden_state.shape
    N = span_indices.shape[1]
    hp = jax.lax.Precision.HIGHEST

    # TimeDistributed(Linear(Dh, 1)) global attention logits
    logits = jnp.einsum("btd,od->bt", hidden_state, w_att, precision=hp) + b_att[0, 0]

    # util.batched_span_select
    starts = span_indices[..., 0:1]                       # (B, N, 1)
    ends = span_indices[..., 1:2]
    widths = ends - starts
    max_w = int(np.asarray(widths).max()) + 1
    rng = jnp.arange(max_w)[None, None, :]                # (1, 1, W)
    span_mask = rng <= widths                             # (B, N, W)
    raw = starts + rng
    span_mask = span_mask & (raw < T) & (raw >= 0)
    idx = jnp.where(span_mask, raw, 0)
    flat = idx.reshape(B, N * max_w)
    emb = jnp.take_along_axis(hidden_state, flat[..., None], axis=1)
    emb = emb.reshape(B, N, max_w, Dh)
    lgt = jnp.take_along_axis(logits, flat, axis=1).reshape(B, N, max_w)

    # util.masked_softmax (default path) + util.weighted_sum
    fmask = span_mask.astype(jnp.float32)
    p = jax.nn.softmax(lgt * fmask, axis=-1) * fmask
    p = p / (p.sum(-1, keepdims=True) + 1e-13)
    span_rep = jnp.einsum("bnw,bnwd->bnd", p, emb, precision=hp)

    # GELU (exact erf) -> Linear -> LayerNorm(eps=1e-12)
    act = 0.5 * span_rep * (1.0 + jax.scipy.special.erf(span_rep / float(math.sqrt(2.0))))
    proj = jnp.einsum("bnd,de->bne", act, w_proj, precision=hp) + b_proj[0]
    mean = proj.mean(-1, keepdims=True)
    var = ((proj - mean) ** 2).mean(-1, keepdims=True)
    return (proj - mean) / jnp.sqrt(var + 1e-12) * gamma[0] + beta[0]


if __name__ == "__main__":
    B, T, DH, N, DE = 4, 16, 64, 8, 128   # batch, seq, hidden, num_spans, entity_hidden
    key = jax.random.PRNGKey(0)
    ks = jax.random.split(key, 9)

    bound = 1.0 / math.sqrt(DH)
    w_att = jax.random.uniform(ks[0], (1, DH), jnp.float32, -bound, bound)
    b_att = jax.random.uniform(ks[1], (1, 1), jnp.float32, -bound, bound)
    w_proj = jax.random.uniform(ks[2], (DH, DE), jnp.float32, -bound, bound)
    b_proj = jax.random.uniform(ks[3], (1, DE), jnp.float32, -bound, bound)
    gamma = jax.random.uniform(ks[4], (1, DE), jnp.float32, 0.5, 1.5)
    beta = jax.random.uniform(ks[5], (1, DE), jnp.float32, -0.1, 0.1)
    params = (w_att, b_att, w_proj, b_proj, gamma, beta)

    hidden_state = jax.random.normal(ks[6], (B, T, DH), jnp.float32)
    span_starts = jax.random.randint(ks[7], (B, N), 0, T)
    span_widths = jax.random.randint(ks[8], (B, N), 0, 5)
    span_ends = jnp.minimum(span_starts + span_widths, T - 1)
    span_indices = jnp.stack([span_starts, span_ends], axis=-1).astype(jnp.int32)

    out = self_attentive_pooling(hidden_state, span_indices, params)
    jax.block_until_ready(out)

    ref = _reference(hidden_state, span_indices, params)
    np.testing.assert_allclose(np.asarray(out), np.asarray(ref), rtol=1e-4, atol=1e-4)

    print("KERNEL_OK")
</pallas_src>

<mosaic_0001>
module attributes {stable_mosaic.version = 11 : i64} {
  func.func @sap_kernel(%arg0: i32, %arg1: memref<1x16x64xf32, #tpu.memory_space<vmem>>, %arg2: memref<1x8x1xi32, #tpu.memory_space<vmem>>, %arg3: memref<1x8x1xi32, #tpu.memory_space<vmem>>, %arg4: memref<1x64xf32, #tpu.memory_space<vmem>>, %arg5: memref<1x1xf32, #tpu.memory_space<vmem>>, %arg6: memref<64x128xf32, #tpu.memory_space<vmem>>, %arg7: memref<1x128xf32, #tpu.memory_space<vmem>>, %arg8: memref<1x128xf32, #tpu.memory_space<vmem>>, %arg9: memref<1x128xf32, #tpu.memory_space<vmem>>, %arg10: memref<1x8x128xf32, #tpu.memory_space<vmem>>) attributes {dimension_semantics = [#tpu.dimension_semantics<parallel>], iteration_bounds = array<i64: 4>, scalar_prefetch = 0 : i64, scratch_operands = 0 : i64, tpu.core_type = #tpu.core_type<tc>, window_params = [{transform_indices = @transform_0, window_bounds = array<i64: 1, 16, 64>}, {transform_indices = @transform_1, window_bounds = array<i64: 1, 8, 1>}, {transform_indices = @transform_2, window_bounds = array<i64: 1, 8, 1>}, {pipeline_mode = #tpu.pipeline_mode<synchronous>, transform_indices = @transform_3, window_bounds = array<i64: 1, 64>}, {pipeline_mode = #tpu.pipeline_mode<synchronous>, transform_indices = @transform_4, window_bounds = array<i64: 1, 1>}, {pipeline_mode = #tpu.pipeline_mode<synchronous>, transform_indices = @transform_5, window_bounds = array<i64: 64, 128>}, {pipeline_mode = #tpu.pipeline_mode<synchronous>, transform_indices = @transform_6, window_bounds = array<i64: 1, 128>}, {pipeline_mode = #tpu.pipeline_mode<synchronous>, transform_indices = @transform_7, window_bounds = array<i64: 1, 128>}, {pipeline_mode = #tpu.pipeline_mode<synchronous>, transform_indices = @transform_8, window_bounds = array<i64: 1, 128>}, {transform_indices = @transform_9, window_bounds = array<i64: 1, 8, 128>}]} {
    %c0 = arith.constant 0 : index
    %c0_0 = arith.constant 0 : index
    %c0_1 = arith.constant 0 : index
    %0 = vector.load %arg1[%c0, %c0_0, %c0_1] : memref<1x16x64xf32, #tpu.memory_space<vmem>>, vector<1x16x64xf32>
    %1 = vector.shape_cast %0 : vector<1x16x64xf32> to vector<16x64xf32>
    %c0_2 = arith.constant 0 : index
    %c0_3 = arith.constant 0 : index
    %c0_4 = arith.constant 0 : index
    %2 = vector.load %arg2[%c0_2, %c0_3, %c0_4] : memref<1x8x1xi32, #tpu.memory_space<vmem>>, vector<1x8x1xi32>
    %3 = vector.shape_cast %2 : vector<1x8x1xi32> to vector<8x1xi32>
    %c0_5 = arith.constant 0 : index
    %c0_6 = arith.constant 0 : index
    %c0_7 = arith.constant 0 : index
    %4 = vector.load %arg3[%c0_5, %c0_6, %c0_7] : memref<1x8x1xi32, #tpu.memory_space<vmem>>, vector<1x8x1xi32>
    %5 = vector.shape_cast %4 : vector<1x8x1xi32> to vector<8x1xi32>
    %c0_8 = arith.constant 0 : index
    %c0_9 = arith.constant 0 : index
    %6 = vector.load %arg4[%c0_8, %c0_9] : memref<1x64xf32, #tpu.memory_space<vmem>>, vector<1x64xf32>
    %cst = arith.constant dense<0.000000e+00> : vector<1x16xf32>
    %7 = tpu.matmul %6, %1, %cst {dimension_numbers = #tpu.dot_dimension_numbers<[1], [1], [0], [0], [0, 0, 1, 0], [], []>} : vector<1x64xf32>, vector<16x64xf32>, vector<1x16xf32> -> vector<1x16xf32>
    %c0_10 = arith.constant 0 : index
    %c0_11 = arith.constant 0 : index
    %8 = vector.load %arg5[%c0_10, %c0_11] : memref<1x1xf32, #tpu.memory_space<vmem>>, vector<1x1xf32>
    %9 = vector.broadcast %8 : vector<1x1xf32> to vector<1x16xf32>
    %10 = arith.addf %7, %9 : vector<1x16xf32>
    %11 = tpu.iota {dimensions = array<i32: 1>} : vector<8x16xi32>
    %12 = vector.broadcast %3 : vector<8x1xi32> to vector<8x16xi32>
    %13 = arith.cmpi sge, %11, %12 : vector<8x16xi32>
    %14 = vector.broadcast %5 : vector<8x1xi32> to vector<8x16xi32>
    %15 = arith.cmpi sle, %11, %14 : vector<8x16xi32>
    %16 = arith.andi %13, %15 : vector<8x16xi1>
    %cst_12 = arith.constant -1.000000e+30 : f32
    %17 = vector.shape_cast %10 : vector<1x16xf32> to vector<1x16xf32>
    %18 = vector.broadcast %17 : vector<1x16xf32> to vector<8x16xf32>
    %19 = vector.broadcast %cst_12 : f32 to vector<8x16xf32>
    %20 = arith.select %16, %18, %19 : vector<8x16xi1>, vector<8x16xf32>
    %cst_13 = arith.constant dense<0xFF800000> : vector<8xf32>
    %21 = vector.multi_reduction <maximumf>, %20, %cst_13 [1] : vector<8x16xf32> to vector<8xf32>
    %22 = vector.shape_cast %21 : vector<8xf32> to vector<8x1xf32>
    %23 = vector.broadcast %22 : vector<8x1xf32> to vector<8x16xf32>
    %24 = arith.subf %20, %23 : vector<8x16xf32>
    %25 = math.exp %24 : vector<8x16xf32>
    %cst_14 = arith.constant 0.000000e+00 : f32
    %26 = vector.broadcast %cst_14 : f32 to vector<8x16xf32>
    %27 = arith.select %16, %25, %26 : vector<8x16xi1>, vector<8x16xf32>
    %cst_15 = arith.constant dense<0.000000e+00> : vector<8xf32>
    %28 = vector.multi_reduction <add>, %27, %cst_15 [1] : vector<8x16xf32> to vector<8xf32>
    %29 = vector.shape_cast %28 : vector<8xf32> to vector<8x1xf32>
    %30 = tpu.reciprocal %29 : vector<8x1xf32> -> vector<8x1xf32>
    %31 = vector.broadcast %30 : vector<8x1xf32> to vector<8x16xf32>
    %32 = arith.mulf %27, %31 : vector<8x16xf32>
    %cst_16 = arith.constant dense<0.000000e+00> : vector<8x64xf32>
    %33 = tpu.matmul %32, %1, %cst_16 {dimension_numbers = #tpu.dot_dimension_numbers<[1], [0], [0], [1], [0, 0, 1, 1], [], []>} : vector<8x16xf32>, vector<16x64xf32>, vector<8x64xf32> -> vector<8x64xf32>
    %cst_17 = arith.constant 5.000000e-01 : f32
    %34 = vector.broadcast %cst_17 : f32 to vector<8x64xf32>
    %35 = arith.mulf %34, %33 : vector<8x64xf32>
    %cst_18 = arith.constant 0.707106769 : f32
    %36 = vector.broadcast %cst_18 : f32 to vector<8x64xf32>
    %37 = arith.mulf %33, %36 : vector<8x64xf32>
    %38 = math.absf %37 : vector<8x64xf32>
    %cst_19 = arith.constant 0.327591091 : f32
    %39 = vector.broadcast %cst_19 : f32 to vector<8x64xf32>
    %40 = arith.mulf %39, %38 : vector<8x64xf32>
    %cst_20 = arith.constant 1.000000e+00 : f32
    %41 = vector.broadcast %cst_20 : f32 to vector<8x64xf32>
    %42 = arith.addf %41, %40 : vector<8x64xf32>
    %cst_21 = arith.constant 1.000000e+00 : f32
    %43 = vector.broadcast %cst_21 : f32 to vector<8x64xf32>
    %44 = arith.divf %43, %42 : vector<8x64xf32>
    %cst_22 = arith.constant 1.06140542 : f32
    %45 = vector.broadcast %cst_22 : f32 to vector<8x64xf32>
    %46 = arith.mulf %45, %44 : vector<8x64xf32>
    %cst_23 = arith.constant -1.45315206 : f32
    %47 = vector.broadcast %cst_23 : f32 to vector<8x64xf32>
    %48 = arith.addf %46, %47 : vector<8x64xf32>
    %49 = arith.mulf %48, %44 : vector<8x64xf32>
    %cst_24 = arith.constant 1.42141378 : f32
    %50 = vector.broadcast %cst_24 : f32 to vector<8x64xf32>
    %51 = arith.addf %49, %50 : vector<8x64xf32>
    %52 = arith.mulf %51, %44 : vector<8x64xf32>
    %cst_25 = arith.constant -0.284496725 : f32
    %53 = vector.broadcast %cst_25 : f32 to vector<8x64xf32>
    %54 = arith.addf %52, %53 : vector<8x64xf32>
    %55 = arith.mulf %54, %44 : vector<8x64xf32>
    %cst_26 = arith.constant 0.254829586 : f32
    %56 = vector.broadcast %cst_26 : f32 to vector<8x64xf32>
    %57 = arith.addf %55, %56 : vector<8x64xf32>
    %58 = arith.mulf %57, %44 : vector<8x64xf32>
    %59 = arith.mulf %38, %38 : vector<8x64xf32>
    %cst_27 = arith.constant 0.000000e+00 : f32
    %60 = vector.broadcast %cst_27 : f32 to vector<8x64xf32>
    %61 = arith.subf %60, %59 : vector<8x64xf32>
    %62 = math.exp %61 : vector<8x64xf32>
    %63 = arith.mulf %58, %62 : vector<8x64xf32>
    %cst_28 = arith.constant 1.000000e+00 : f32
    %64 = vector.broadcast %cst_28 : f32 to vector<8x64xf32>
    %65 = arith.subf %64, %63 : vector<8x64xf32>
    %cst_29 = arith.constant 0.000000e+00 : f32
    %66 = vector.broadcast %cst_29 : f32 to vector<8x64xf32>
    %67 = arith.cmpf oge, %37, %66 : vector<8x64xf32>
    %cst_30 = arith.constant 0.000000e+00 : f32
    %68 = vector.broadcast %cst_30 : f32 to vector<8x64xf32>
    %69 = arith.subf %68, %65 : vector<8x64xf32>
    %70 = arith.select %67, %65, %69 : vector<8x64xi1>, vector<8x64xf32>
    %cst_31 = arith.constant 1.000000e+00 : f32
    %71 = vector.broadcast %cst_31 : f32 to vector<8x64xf32>
    %72 = arith.addf %71, %70 : vector<8x64xf32>
    %73 = arith.mulf %35, %72 : vector<8x64xf32>
    %c0_32 = arith.constant 0 : index
    %c0_33 = arith.constant 0 : index
    %74 = vector.load %arg6[%c0_32, %c0_33] : memref<64x128xf32, #tpu.memory_space<vmem>>, vector<64x128xf32>
    %cst_34 = arith.constant dense<0.000000e+00> : vector<8x128xf32>
    %75 = tpu.matmul %73, %74, %cst_34 {dimension_numbers = #tpu.dot_dimension_numbers<[1], [0], [0], [1], [0, 0, 1, 1], [], []>} : vector<8x64xf32>, vector<64x128xf32>, vector<8x128xf32> -> vector<8x128xf32>
    %c0_35 = arith.constant 0 : index
    %c0_36 = arith.constant 0 : index
    %76 = vector.load %arg7[%c0_35, %c0_36] : memref<1x128xf32, #tpu.memory_space<vmem>>, vector<1x128xf32>
    %77 = vector.broadcast %76 : vector<1x128xf32> to vector<8x128xf32>
    %78 = arith.addf %75, %77 : vector<8x128xf32>
    %cst_37 = arith.constant dense<0.000000e+00> : vector<8xf32>
    %79 = vector.multi_reduction <add>, %78, %cst_37 [1] : vector<8x128xf32> to vector<8xf32>
    %80 = vector.shape_cast %79 : vector<8xf32> to vector<8x1xf32>
    %cst_38 = arith.constant 1.280000e+02 : f32
    %81 = vector.broadcast %cst_38 : f32 to vector<8x1xf32>
    %82 = arith.divf %80, %81 : vector<8x1xf32>
    %83 = vector.broadcast %82 : vector<8x1xf32> to vector<8x128xf32>
    %84 = arith.subf %78, %83 : vector<8x128xf32>
    %85 = arith.mulf %84, %84 : vector<8x128xf32>
    %cst_39 = arith.constant dense<0.000000e+00> : vector<8xf32>
    %86 = vector.multi_reduction <add>, %85, %cst_39 [1] : vector<8x128xf32> to vector<8xf32>
    %87 = vector.shape_cast %86 : vector<8xf32> to vector<8x1xf32>
    %cst_40 = arith.constant 1.280000e+02 : f32
    %88 = vector.broadcast %cst_40 : f32 to vector<8x1xf32>
    %89 = arith.divf %87, %88 : vector<8x1xf32>
    %cst_41 = arith.constant 9.99999996E-13 : f32
    %90 = vector.broadcast %cst_41 : f32 to vector<8x1xf32>
    %91 = arith.addf %89, %90 : vector<8x1xf32>
    %92 = math.rsqrt %91 : vector<8x1xf32>
    %93 = vector.broadcast %92 : vector<8x1xf32> to vector<8x128xf32>
    %94 = arith.mulf %84, %93 : vector<8x128xf32>
    %c0_42 = arith.constant 0 : index
    %c0_43 = arith.constant 0 : index
    %95 = vector.load %arg8[%c0_42, %c0_43] : memref<1x128xf32, #tpu.memory_space<vmem>>, vector<1x128xf32>
    %96 = vector.broadcast %95 : vector<1x128xf32> to vector<8x128xf32>
    %97 = arith.mulf %94, %96 : vector<8x128xf32>
    %c0_44 = arith.constant 0 : index
    %c0_45 = arith.constant 0 : index
    %98 = vector.load %arg9[%c0_44, %c0_45] : memref<1x128xf32, #tpu.memory_space<vmem>>, vector<1x128xf32>
    %99 = vector.broadcast %98 : vector<1x128xf32> to vector<8x128xf32>
    %100 = arith.addf %97, %99 : vector<8x128xf32>
    %c0_46 = arith.constant 0 : index
    %c0_47 = arith.constant 0 : index
    %c0_48 = arith.constant 0 : index
    %101 = vector.load %arg10[%c0_46, %c0_47, %c0_48] : memref<1x8x128xf32, #tpu.memory_space<vmem>>, vector<1x8x128xf32>
    %102 = vector.shape_cast %101 : vector<1x8x128xf32> to vector<8x128xf32>
    %103 = vector.shape_cast %100 : vector<8x128xf32> to vector<1x8x128xf32>
    tpu.vector_store %arg10[%c0_46, %c0_47, %c0_48], %103 {strides = array<i32>} : memref<1x8x128xf32, #tpu.memory_space<vmem>>, vector<1x8x128xf32>,
    return
  }
  func.func @transform_0(%arg0: i32) -> (i32, i32, i32) {
    %c0_i32 = arith.constant 0 : i32
    %c0_i32_0 = arith.constant 0 : i32
    %c0_i32_1 = arith.constant 0 : i32
    return %arg0, %c0_i32, %c0_i32_0 : i32, i32, i32
  }
  func.func @transform_1(%arg0: i32) -> (i32, i32, i32) {
    %c0_i32 = arith.constant 0 : i32
    %c0_i32_0 = arith.constant 0 : i32
    %c0_i32_1 = arith.constant 0 : i32
    return %arg0, %c0_i32, %c0_i32_0 : i32, i32, i32
  }
  func.func @transform_2(%arg0: i32) -> (i32, i32, i32) {
    %c0_i32 = arith.constant 0 : i32
    %c0_i32_0 = arith.constant 0 : i32
    %c0_i32_1 = arith.constant 0 : i32
    return %arg0, %c0_i32, %c0_i32_0 : i32, i32, i32
  }
  func.func @transform_3(%arg0: i32) -> (i32, i32) {
    %c0_i32 = arith.constant 0 : i32
    %c0_i32_0 = arith.constant 0 : i32
    %c0_i32_1 = arith.constant 0 : i32
    return %c0_i32, %c0_i32_0 : i32, i32
  }
  func.func @transform_4(%arg0: i32) -> (i32, i32) {
    %c0_i32 = arith.constant 0 : i32
    %c0_i32_0 = arith.constant 0 : i32
    %c0_i32_1 = arith.constant 0 : i32
    return %c0_i32, %c0_i32_0 : i32, i32
  }
  func.func @transform_5(%arg0: i32) -> (i32, i32) {
    %c0_i32 = arith.constant 0 : i32
    %c0_i32_0 = arith.constant 0 : i32
    %c0_i32_1 = arith.constant 0 : i32
    return %c0_i32, %c0_i32_0 : i32, i32
  }
  func.func @transform_6(%arg0: i32) -> (i32, i32) {
    %c0_i32 = arith.constant 0 : i32
    %c0_i32_0 = arith.constant 0 : i32
    %c0_i32_1 = arith.constant 0 : i32
    return %c0_i32, %c0_i32_0 : i32, i32
  }
  func.func @transform_7(%arg0: i32) -> (i32, i32) {
    %c0_i32 = arith.constant 0 : i32
    %c0_i32_0 = arith.constant 0 : i32
    %c0_i32_1 = arith.constant 0 : i32
    return %c0_i32, %c0_i32_0 : i32, i32
  }
  func.func @transform_8(%arg0: i32) -> (i32, i32) {
    %c0_i32 = arith.constant 0 : i32
    %c0_i32_0 = arith.constant 0 : i32
    %c0_i32_1 = arith.constant 0 : i32
    return %c0_i32, %c0_i32_0 : i32, i32
  }
  func.func @transform_9(%arg0: i32) -> (i32, i32, i32) {
    %c0_i32 = arith.constant 0 : i32
    %c0_i32_0 = arith.constant 0 : i32
    %c0_i32_1 = arith.constant 0 : i32
    return %arg0, %c0_i32, %c0_i32_0 : i32, i32, i32
  }
}

</mosaic_0001>

<llo_original>
// kernel: tpu_custom_call.1
$region0: #{tpu_custom_call.1}
  #allocation0 [shape = 'u32[]', space=smem, size = 0x4, offset = 0x4, fixed_abs, tag = 'smem constant byte address 0x4 - core index']
  #allocation1 [shape = 'u32[144,128]{1,0:T(1,128)}', space=vmem, size = 0x12000, scoped, tag = 'internal scratch']
  #allocation2 [shape = 'f32[1,1]{1,0:T(1,128)S(1)}', space=vmem, size = 0x200, scoped, tag = 'scoped memory for tpu_custom_call.1']
  %s0 = inlined_call_operand.vmem [shape: f32[4,16,64], index: 0, kind: input, shape index: {}]
  %s1 = inlined_call_operand.vmem [shape: s32[4,8,1], index: 1, kind: input, shape index: {}]
  %s2 = inlined_call_operand.vmem [shape: s32[4,8,1], index: 2, kind: input, shape index: {}]
  %s3 = inlined_call_operand.vmem [shape: f32[1,64], index: 3, kind: input, shape index: {}]
  %s4 = inlined_call_operand.<no memory space> [shape: f32[1,1], index: 4, kind: input, shape index: {}]
  %s5 = inlined_call_operand.hbm [shape: f32[64,128], index: 5, kind: input, shape index: {}]
  %s6 = inlined_call_operand.vmem [shape: f32[1,128], index: 6, kind: input, shape index: {}]
  %s7 = inlined_call_operand.vmem [shape: f32[1,128], index: 7, kind: input, shape index: {}]
  %s8 = inlined_call_operand.vmem [shape: f32[1,128], index: 8, kind: input, shape index: {}]
  %s9 = inlined_call_operand.hbm [shape: f32[4,8,128], index: 9, kind: output, shape index: {}]
  %s10 = sld [smem:[#allocation0]]
  $region73: #{tpu_custom_call.1} parent=0
    _
  %s12 = ssub.s32 1, %s10
  %s13 = scalar_select 0, %s12, %s10
  %v14 = vstv %s4
  %15 = vst [vmem:[#allocation2] sm:$0x1] %v14
  $region1: #{tpu_custom_call.1} parent=0
    #allocation3 [shape = 'u8[32768]{0}', space=vmem, size = 0x8000, scoped, tag = 'input window, operand 5, single buffered']
    #allocation4 [shape = 's32[2]{0}', space=sflag, size = 0x8, scoped, tag = 'scoped memory for tpu_custom_call.1']
    #allocation5 [shape = 's32[2]{0}', space=sflag, size = 0x8, scoped, tag = 'scoped memory for tpu_custom_call.1']
    #allocation6 [shape = 'u8[8192]{0}', space=vmem, size = 0x2000, scoped, tag = 'output window, operand 0']
    %16 = vsyncpa [#allocation4], 0
    %17 = vsyncpa [#allocation5], 0
    %s18 = scalar_lea.sflag [#allocation5], 1
    %19 = vsyncpa %s18, 0
    loop: start=0, step=1, limit=6
    $region2: #{tpu_custom_call.1} parent=1 // loop_pre_header
      _
    $region3: #{tpu_custom_call.1} parent=1 // loop_header
      %s21 = sphi 0, %s25
      %p22 = scmp.ge.s32.totalorder %s21, 6
      %s31 = sphi 0, %s33
      %s34 = sphi 0, %s31
      %s35 = sphi 0, %s34
      %s51 = sphi 0, %s35
      %s57 = sphi 0, %s59
      %s60 = sphi 0, %s57
      %s61 = sphi 0, %s60
      %s77 = sphi 0, %s61
      %s83 = sphi 0, %s85
      %s86 = sphi 0, %s83
      %s87 = sphi 0, %s86
      %s103 = sphi 0, %s87
      %s107 = sphi 0, %s107
      %s109 = sphi 0, %s107
      %s110 = sphi 0, %s109
      %s124 = sphi 0, %s110
      %s128 = sphi 0, %s128
      %s130 = sphi 0, %s128
      %s131 = sphi 0, %s130
      %s145 = sphi 0, %s131
      %s149 = sphi 0, %s149
      %s151 = sphi 0, %s149
      %s152 = sphi 0, %s151
      %s166 = sphi 0, %s152
      %s170 = sphi 0, %s170
      %s172 = sphi 0, %s170
      %s173 = sphi 0, %s172
      %s187 = sphi 0, %s173
      %s191 = sphi 0, %s191
      %s193 = sphi 0, %s191
      %s194 = sphi 0, %s193
      %s208 = sphi 0, %s194
      %s212 = sphi 0, %s212
      %s214 = sphi 0, %s212
      %s215 = sphi 0, %s214
      %s229 = sphi 0, %s215
      %s235 = sphi 0, %s237
      %s238 = sphi 0, %s235
      %s239 = sphi 0, %s238
      %s255 = sphi 0, %s239
    $region4: #{tpu_custom_call.1} parent=1 // loop_header_branch
      %24 = sbr.rel (%p22) target = $region8
    $region5: #{tpu_custom_call.1} parent=1 // loop_body
      %s26 = ssub.s32 %s21, 1
      %s27 = ssub.s32 %s21, 2
      %s28 = sadd.s32 %s21, 1
      %s29 = ssub.s32 %s21, %s28
      %p30 = scmp.eq.s32.totalorder %s29, 0
      %s32 = sadd.s32 %s31, 1
      %s33 = scalar_select %p30, %s31, %s32
      %p36 = pneg %p30
      %p37 = scmp.eq.s32.totalorder %s21, 3
      %p38 = por %p36, %p37
      %p39 = scmp.ne.s32.totalorder %s31, %s34
      %p40 = scmp.eq.s32.totalorder %s21, 0
      %p41 = por %p39, %p40
      %p42 = scmp.ne.s32.totalorder %s31, %s34
      %p43 = scmp.eq.s32.totalorder %s26, 3
      %p44 = por %p42, %p43
      %p45 = scmp.ne.s32.totalorder %s34, %s35
      %p46 = scmp.eq.s32.totalorder %s26, 0
      %p47 = por %p45, %p46
      %p48 = scmp.ne.s32.totalorder %s34, %s35
      %p49 = scmp.eq.s32.totalorder %s27, 3
      %p50 = por %p48, %p49
      %p52 = scmp.ne.s32.totalorder %s35, %s51
      %p53 = scmp.eq.s32.totalorder %s27, 0
      %p54 = por %p52, %p53
      %s55 = ssub.s32 %s21, %s28
      %p56 = scmp.eq.s32.totalorder %s55, 0
      %s58 = sadd.s32 %s57, 1
      %s59 = scalar_select %p56, %s57, %s58
      %p62 = pneg %p56
      %p63 = scmp.eq.s32.totalorder %s21, 3
      %p64 = por %p62, %p63
      %p65 = scmp.ne.s32.totalorder %s57, %s60
      %p66 = scmp.eq.s32.totalorder %s21, 0
      %p67 = por %p65, %p66
      %p68 = scmp.ne.s32.totalorder %s57, %s60
      %p69 = scmp.eq.s32.totalorder %s26, 3
      %p70 = por %p68, %p69
      %p71 = scmp.ne.s32.totalorder %s60, %s61
      %p72 = scmp.eq.s32.totalorder %s26, 0
      %p73 = por %p71, %p72
      %p74 = scmp.ne.s32.totalorder %s60, %s61
      %p75 = scmp.eq.s32.totalorder %s27, 3
      %p76 = por %p74, %p75
      %p78 = scmp.ne.s32.totalorder %s61, %s77
      %p79 = scmp.eq.s32.totalorder %s27, 0
      %p80 = por %p78, %p79
      %s81 = ssub.s32 %s21, %s28
      %p82 = scmp.eq.s32.totalorder %s81, 0
      %s84 = sadd.s32 %s83, 1
      %s85 = scalar_select %p82, %s83, %s84
      %p88 = pneg %p82
      %p89 = scmp.eq.s32.totalorder %s21, 3
      %p90 = por %p88, %p89
      %p91 = scmp.ne.s32.totalorder %s83, %s86
      %p92 = scmp.eq.s32.totalorder %s21, 0
      %p93 = por %p91, %p92
      %p94 = scmp.ne.s32.totalorder %s83, %s86
      %p95 = scmp.eq.s32.totalorder %s26, 3
      %p96 = por %p94, %p95
      %p97 = scmp.ne.s32.totalorder %s86, %s87
      %p98 = scmp.eq.s32.totalorder %s26, 0
      %p99 = por %p97, %p98
      %p100 = scmp.ne.s32.totalorder %s86, %s87
      %p101 = scmp.eq.s32.totalorder %s27, 3
      %p102 = por %p100, %p101
      %p104 = scmp.ne.s32.totalorder %s87, %s103
      %p105 = scmp.eq.s32.totalorder %s27, 0
      %p106 = por %p104, %p105
      %s108 = sadd.s32 %s107, 1
      %p111 = scmp.eq.s32.totalorder %s21, 3
      %p112 = scmp.ne.s32.totalorder %s107, %s109
      %p113 = scmp.eq.s32.totalorder %s21, 0
      %p114 = por %p112, %p113
      %p115 = scmp.ne.s32.totalorder %s107, %s109
      %p116 = scmp.eq.s32.totalorder %s26, 3
      %p117 = por %p115, %p116
      %p118 = scmp.ne.s32.totalorder %s109, %s110
      %p119 = scmp.eq.s32.totalorder %s26, 0
      %p120 = por %p118, %p119
      %p121 = scmp.ne.s32.totalorder %s109, %s110
      %p122 = scmp.eq.s32.totalorder %s27, 3
      %p123 = por %p121, %p122
      %p125 = scmp.ne.s32.totalorder %s110, %s124
      %p126 = scmp.eq.s32.totalorder %s27, 0
      %p127 = por %p125, %p126
      %s129 = sadd.s32 %s128, 1
      %p132 = scmp.eq.s32.totalorder %s21, 3
      %p133 = scmp.ne.s32.totalorder %s128, %s130
      %p134 = scmp.eq.s32.totalorder %s21, 0
      %p135 = por %p133, %p134
      %p136 = scmp.ne.s32.totalorder %s128, %s130
      %p137 = scmp.eq.s32.totalorder %s26, 3
      %p138 = por %p136, %p137
      %p139 = scmp.ne.s32.totalorder %s130, %s131
      %p140 = scmp.eq.s32.totalorder %s26, 0
      %p141 = por %p139, %p140
      %p142 = scmp.ne.s32.totalorder %s130, %s131
      %p143 = scmp.eq.s32.totalorder %s27, 3
      %p144 = por %p142, %p143
      %p146 = scmp.ne.s32.totalorder %s131, %s145
      %p147 = scmp.eq.s32.totalorder %s27, 0
      %p148 = por %p146, %p147
      %s150 = sadd.s32 %s149, 1
      %p153 = scmp.eq.s32.totalorder %s21, 3
      %p154 = scmp.ne.s32.totalorder %s149, %s151
      %p155 = scmp.eq.s32.totalorder %s21, 0
      %p156 = por %p154, %p155
      %p157 = scmp.ne.s32.totalorder %s149, %s151
      %p158 = scmp.eq.s32.totalorder %s26, 3
      %p159 = por %p157, %p158
      %p160 = scmp.ne.s32.totalorder %s151, %s152
      %p161 = scmp.eq.s32.totalorder %s26, 0
      %p162 = por %p160, %p161
      %p163 = scmp.ne.s32.totalorder %s151, %s152
      %p164 = scmp.eq.s32.totalorder %s27, 3
      %p165 = por %p163, %p164
      %p167 = scmp.ne.s32.totalorder %s152, %s166
      %p168 = scmp.eq.s32.totalorder %s27, 0
      %p169 = por %p167, %p168
      %s171 = sadd.s32 %s170, 1
      %p174 = scmp.eq.s32.totalorder %s21, 3
      %p175 = scmp.ne.s32.totalorder %s170, %s172
      %p176 = scmp.eq.s32.totalorder %s21, 0
      %p177 = por %p175, %p176
      %p178 = scmp.ne.s32.totalorder %s170, %s172
      %p179 = scmp.eq.s32.totalorder %s26, 3
      %p180 = por %p178, %p179
      %p181 = scmp.ne.s32.totalorder %s172, %s173
      %p182 = scmp.eq.s32.totalorder %s26, 0
      %p183 = por %p181, %p182
      %p184 = scmp.ne.s32.totalorder %s172, %s173
      %p185 = scmp.eq.s32.totalorder %s27, 3
      %p186 = por %p184, %p185
      %p188 = scmp.ne.s32.totalorder %s173, %s187
      %p189 = scmp.eq.s32.totalorder %s27, 0
      %p190 = por %p188, %p189
      %s192 = sadd.s32 %s191, 1
      %p195 = scmp.eq.s32.totalorder %s21, 3
      %p196 = scmp.ne.s32.totalorder %s191, %s193
      %p197 = scmp.eq.s32.totalorder %s21, 0
      %p198 = por %p196, %p197
      %p199 = scmp.ne.s32.totalorder %s191, %s193
      %p200 = scmp.eq.s32.totalorder %s26, 3
      %p201 = por %p199, %p200
      %p202 = scmp.ne.s32.totalorder %s193, %s194
      %p203 = scmp.eq.s32.totalorder %s26, 0
      %p204 = por %p202, %p203
      %p205 = scmp.ne.s32.totalorder %s193, %s194
      %p206 = scmp.eq.s32.totalorder %s27, 3
      %p207 = por %p205, %p206
      %p209 = scmp.ne.s32.totalorder %s194, %s208
      %p210 = scmp.eq.s32.totalorder %s27, 0
      %p211 = por %p209, %p210
      %s213 = sadd.s32 %s212, 1
      %p216 = scmp.eq.s32.totalorder %s21, 3
      %p217 = scmp.ne.s32.totalorder %s212, %s214
      %p218 = scmp.eq.s32.totalorder %s21, 0
      %p219 = por %p217, %p218
      %p220 = scmp.ne.s32.totalorder %s212, %s214
      %p221 = scmp.eq.s32.totalorder %s26, 3
      %p222 = por %p220, %p221
      %p223 = scmp.ne.s32.totalorder %s214, %s215
      %p224 = scmp.eq.s32.totalorder %s26, 0
      %p225 = por %p223, %p224
      %p226 = scmp.ne.s32.totalorder %s214, %s215
      %p227 = scmp.eq.s32.totalorder %s27, 3
      %p228 = por %p226, %p227
      %p230 = scmp.ne.s32.totalorder %s215, %s229
      %p231 = scmp.eq.s32.totalorder %s27, 0
      %p232 = por %p230, %p231
      %s233 = ssub.s32 %s21, %s28
      %p234 = scmp.eq.s32.totalorder %s233, 0
      %s236 = sadd.s32 %s235, 1
      %s237 = scalar_select %p234, %s235, %s236
      %p240 = pneg %p234
      %p241 = scmp.eq.s32.totalorder %s21, 3
      %p242 = por %p240, %p241
      %p243 = scmp.ne.s32.totalorder %s235, %s238
      %p244 = scmp.eq.s32.totalorder %s21, 0
      %p245 = por %p243, %p244
      %p246 = scmp.ne.s32.totalorder %s235, %s238
      %p247 = scmp.eq.s32.totalorder %s26, 3
      %p248 = por %p246, %p247
      %p249 = scmp.ne.s32.totalorder %s238, %s239
      %p250 = scmp.eq.s32.totalorder %s26, 0
      %p251 = por %p249, %p250
      %p252 = scmp.ne.s32.totalorder %s238, %s239
      %p253 = scmp.eq.s32.totalorder %s27, 3
      %p254 = por %p252, %p253
      %p256 = scmp.ne.s32.totalorder %s239, %s255
      %p257 = scmp.eq.s32.totalorder %s27, 0
      %p258 = por %p256, %p257
      %p259 = scmp.le.s32.totalorder 1, %s21
      %p260 = scmp.lt.s32.totalorder %s21, 5
      %p261 = pnand %p259, %p260
      %p262 = pneg %p261
      // Predicated region
      $region9: #{tpu_custom_call.1} parent=5 // pred_check
        _
      $region10: #{tpu_custom_call.1} parent=5 // pred_check_branch
        %264 = sbr.rel (%p261) target = $region12
      $region11: #{tpu_custom_call.1} parent=5 // pred_region
        %s265 = ssub.s32 %s21, 1
        // Predicated region
        $region13: #{tpu_custom_call.1} parent=11 // pred_check
          %p266 = pneg %p120
        $region14: #{tpu_custom_call.1} parent=11 // pred_check_branch
          %268 = sbr.rel (%p266) target = $region16
        $region15: #{tpu_custom_call.1} parent=11 // pred_region
          _
        $region16: #{tpu_custom_call.1} parent=11 // pred_fallthru
          _
        // Predicated region
        $region17: #{tpu_custom_call.1} parent=11 // pred_check
          %p269 = pneg %p141
        $region18: #{tpu_custom_call.1} parent=11 // pred_check_branch
          %271 = sbr.rel (%p269) target = $region20
        $region19: #{tpu_custom_call.1} parent=11 // pred_region
          _
        $region20: #{tpu_custom_call.1} parent=11 // pred_fallthru
          _
        // Predicated region
        $region21: #{tpu_custom_call.1} parent=11 // pred_check
          %p272 = pneg %p162
        $region22: #{tpu_custom_call.1} parent=11 // pred_check_branch
          %274 = sbr.rel (%p272) target = $region24
        $region23: #{tpu_custom_call.1} parent=11 // pred_region
          %s276 = ssub.s32 1024, 1024
          %277 = vsyncadd [#allocation4], %s276
          %s278 = sshll.u32 [#allocation3], 4
          %s279 = int_to_ptr.vmem [resolvable:$true] %s278
          %284 = dma.hbm_to_vmem [thread:$0]  %s5, 1024, %s279, [#allocation4], 128, 128, 8
        $region24: #{tpu_custom_call.1} parent=11 // pred_fallthru
          _
        // Predicated region
        $region25: #{tpu_custom_call.1} parent=11 // pred_check
          %p285 = pneg %p183
        $region26: #{tpu_custom_call.1} parent=11 // pred_check_branch
          %287 = sbr.rel (%p285) target = $region28
        $region27: #{tpu_custom_call.1} parent=11 // pred_region
          _
        $region28: #{tpu_custom_call.1} parent=11 // pred_fallthru
          _
        // Predicated region
        $region29: #{tpu_custom_call.1} parent=11 // pred_check
          %p288 = pneg %p204
        $region30: #{tpu_custom_call.1} parent=11 // pred_check_branch
          %290 = sbr.rel (%p288) target = $region32
        $region31: #{tpu_custom_call.1} parent=11 // pred_region
          _
        $region32: #{tpu_custom_call.1} parent=11 // pred_fallthru
          _
        // Predicated region
        $region33: #{tpu_custom_call.1} parent=11 // pred_check
          %p291 = pneg %p225
        $region34: #{tpu_custom_call.1} parent=11 // pred_check_branch
          %293 = sbr.rel (%p291) target = $region36
        $region35: #{tpu_custom_call.1} parent=11 // pred_region
          _
        $region36: #{tpu_custom_call.1} parent=11 // pred_fallthru
          _
      $region12: #{tpu_custom_call.1} parent=5 // pred_fallthru
        _
      %p294 = scmp.lt.s32.totalorder %s21, 4
      // Predicated region
      $region37: #{tpu_custom_call.1} parent=5 // pred_check
        %p295 = pneg %p294
      $region38: #{tpu_custom_call.1} parent=5 // pred_check_branch
        %297 = sbr.rel (%p295) target = $region40
      $region39: #{tpu_custom_call.1} parent=5 // pred_region
        // Predicated region
        $region41: #{tpu_custom_call.1} parent=39 // pred_check
          %p298 = pneg %p41
        $region42: #{tpu_custom_call.1} parent=39 // pred_check_branch
          %300 = sbr.rel (%p298) target = $region44
        $region43: #{tpu_custom_call.1} parent=39 // pred_region
          %p301 = scmp.lt.s32.totalorder %s21, 3
          %s302 = scalar_select %p301, %s21, 3
          %s303 = smul.addr %s302, 2
          %s304 = smul.addr %s303, 8
          %s305 = scalar_lea.vmem %s0, %s304
        $region44: #{tpu_custom_call.1} parent=39 // pred_fallthru
          _
        // Predicated region
        $region45: #{tpu_custom_call.1} parent=39 // pred_check
          %p306 = pneg %p67
        $region46: #{tpu_custom_call.1} parent=39 // pred_check_branch
          %308 = sbr.rel (%p306) target = $region48
        $region47: #{tpu_custom_call.1} parent=39 // pred_region
          %p309 = scmp.lt.s32.totalorder %s21, 3
          %s310 = scalar_select %p309, %s21, 3
          %s311 = smul.addr %s310, 8
          %s312 = scalar_lea.vmem %s1, %s311
        $region48: #{tpu_custom_call.1} parent=39 // pred_fallthru
          _
        // Predicated region
        $region49: #{tpu_custom_call.1} parent=39 // pred_check
          %p313 = pneg %p93
        $region50: #{tpu_custom_call.1} parent=39 // pred_check_branch
          %315 = sbr.rel (%p313) target = $region52
        $region51: #{tpu_custom_call.1} parent=39 // pred_region
          %p316 = scmp.lt.s32.totalorder %s21, 3
          %s317 = scalar_select %p316, %s21, 3
          %s318 = smul.addr %s317, 8
          %s319 = scalar_lea.vmem %s2, %s318
        $region52: #{tpu_custom_call.1} parent=39 // pred_fallthru
          _
      $region40: #{tpu_custom_call.1} parent=5 // pred_fallthru
        _
      %p320 = scmp.le.s32.totalorder 1, %s21
      %p321 = scmp.lt.s32.totalorder %s21, 5
      %p322 = pnand %p320, %p321
      %p323 = pneg %p322
      // Predicated region
      $region53: #{tpu_custom_call.1} parent=5 // pred_check
        _
      $region54: #{tpu_custom_call.1} parent=5 // pred_check_branch
        %325 = sbr.rel (%p322) target = $region56
      $region55: #{tpu_custom_call.1} parent=5 // pred_region
        %s326 = ssub.s32 %s21, 1
        // Predicated region
        $region57: #{tpu_custom_call.1} parent=55 // pred_check
          %p327 = pneg %p162
        $region58: #{tpu_custom_call.1} parent=55 // pred_check_branch
          %329 = sbr.rel (%p327) target = $region60
        $region59: #{tpu_custom_call.1} parent=55 // pred_region
          %330 = dma.done [#allocation4], 1024
        $region60: #{tpu_custom_call.1} parent=55 // pred_fallthru
          _
        %p331 = scmp.lt.s32.totalorder %s26, 3
        %s332 = scalar_select %p331, %s26, 3
        %s333 = smul.addr %s332, 2
        %s334 = smul.addr %s333, 8
        %s335 = scalar_lea.vmem %s0, %s334
        %p336 = pneg %p47
        %p337 = pneg %p44
        %p338 = scmp.lt.s32.totalorder %s26, 3
        %s339 = scalar_select %p338, %s26, 3
        %s340 = smul.addr %s339, 8
        %s341 = scalar_lea.vmem %s1, %s340
        %p342 = pneg %p73
        %p343 = pneg %p70
        %p344 = scmp.lt.s32.totalorder %s26, 3
        %s345 = scalar_select %p344, %s26, 3
        %s346 = smul.addr %s345, 8
        %s347 = scalar_lea.vmem %s2, %s346
        %p348 = pneg %p99
        %p349 = pneg %p96
        %p350 = pneg %p120
        %p351 = pneg %p117
        %p352 = pneg %p141
        %p353 = pneg %p138
        %p354 = pneg %p162
        %p355 = pneg %p159
        %p356 = pneg %p183
        %p357 = pneg %p180
        %p358 = pneg %p204
        %p359 = pneg %p201
        %p360 = pneg %p225
        %p361 = pneg %p222
        %p362 = pneg %p251
        %p363 = pneg %p248
        %s364 = sand.u32 %s238, 1
        %s365 = scalar_lea.sflag [#allocation5], %s364
        %s366 = sand.u32 %s238, 1
        %s367 = smul.addr %s366, 8
        %s368 = scalar_lea.vmem [#allocation6], %s367
        %p369 = scmp.lt.s32.totalorder %s26, 3
        %s370 = scalar_select %p369, %s26, 3
        %s371 = smul.addr %s370, 2
        %s372 = smul.addr %s371, 8
        %s373 = scalar_lea.vmem %s0, %s372
        %p374 = scmp.lt.s32.totalorder %s26, 3
        %s375 = scalar_select %p374, %s26, 3
        %s376 = smul.addr %s375, 8
        %s377 = scalar_lea.vmem %s1, %s376
        %p378 = scmp.lt.s32.totalorder %s26, 3
        %s379 = scalar_select %p378, %s26, 3
        %s380 = smul.addr %s379, 8
        %s381 = scalar_lea.vmem %s2, %s380
        %v382 = vld [vmem:[%s373] sm:$0xff]
        %v383 = vld [vmem:[%s373 + $0x8] sm:$0xff]
        %v384 = vld [vmem:[%s377] sm:$0xff]
        %v385 = vld [vmem:[%s381] sm:$0xff]
        %v386 = vld [vmem:[%s3] sm:$0x1]
        %v387 = vld [vmem:[#allocation2] sm:$0x1]
        %389 = vset.pattern.permute.xlu0 0
        %390 = vperm.xlu0 %389, %v387
        %v391 = vpop.permute.xlu0 %390
        %v393 = vlaneseq
        %v394 = vshrl.u32 %v393, 7
        %v395 = vsub.s32 0, %v394
        %v396 = vrot.slane %v391, %v395
        %vm397 = vcmask 523264
        %v399 = vsel %vm397, %v386, 0
        %v402 = vsel %vm397, %v382, 0
        %v405 = vsel %vm397, %v383, 0
        %407 = vmatprep.subr.mxu0 0.0
        %408 = vmatpush1.xpose.msra.mxu0 %v402
        %409 = vmatprep.subr.mxu0 0.0
        %410 = vmatpush1.xpose.msra.mxu0 %v405
        %411 = vmatprep.subr.mxu0 0.0
        %412 = vmatpush1.xpose.msra.mxu0 0.0
        %413 = vmatprep.subr.mxu0 0.0
        %414 = vmatpush1.xpose.msra.mxu0 0.0
        %415 = vmatprep.subr.mxu0 0.0
        %416 = vmatpush1.xpose.msra.mxu0 0.0
        %417 = vmatprep.subr.mxu0 0.0
        %418 = vmatpush1.xpose.msra.mxu0 0.0
        %419 = vmatprep.subr.mxu0 0.0
        %420 = vmatpush1.xpose.msra.mxu0 0.0
        %421 = vmatprep.subr.mxu0 0.0
        %422 = vmatpush1.xpose.msra.mxu0 0.0
        %423 = vmatprep.subr.mxu0 0.0
        %424 = vmatpush1.xpose.msra.mxu0 0.0
        %425 = vmatprep.subr.mxu0 0.0
        %426 = vmatpush1.xpose.msra.mxu0 0.0
        %427 = vmatprep.subr.mxu0 0.0
        %428 = vmatpush1.xpose.msra.mxu0 0.0
        %429 = vmatprep.subr.mxu0 0.0
        %430 = vmatpush1.xpose.msra.mxu0 0.0
        %431 = vmatprep.subr.mxu0 0.0
        %432 = vmatpush1.xpose.msra.mxu0 0.0
        %433 = vmatprep.subr.mxu0 0.0
        %434 = vmatpush1.xpose.msra.mxu0 0.0
        %435 = vmatprep.subr.mxu0 0.0
        %436 = vmatpush1.xpose.msra.mxu0 0.0
        %437 = vmatprep.subr.mxu0 0.0
        %438 = vmatpush1.xpose.msra.mxu0 0.0
        %439 = vmatprep.subr.mxu0 0.0
        %440 = vmatpush1.xpose.msra.mxu0 0.0
        %441 = vmatprep.subr.mxu0 0.0
        %442 = vmatpush1.xpose.msra.mxu0 0.0
        %443 = vmatprep.subr.mxu0 0.0
        %444 = vmatpush1.xpose.msra.mxu0 0.0
        %445 = vmatprep.subr.mxu0 0.0
        %446 = vmatpush1.xpose.msra.mxu0 0.0
        %447 = vmatprep.subr.mxu0 0.0
        %448 = vmatpush1.xpose.msra.mxu0 0.0
        %449 = vmatprep.subr.mxu0 0.0
        %450 = vmatpush1.xpose.msra.mxu0 0.0
        %451 = vmatprep.subr.mxu0 0.0
        %452 = vmatpush1.xpose.msra.mxu0 0.0
        %453 = vmatprep.subr.mxu0 0.0
        %454 = vmatpush1.xpose.msra.mxu0 0.0
        %455 = vmatprep.subr.mxu0 0.0
        %456 = vmatpush1.xpose.msra.mxu0 0.0
        %457 = vmatprep.subr.mxu0 0.0
        %458 = vmatpush1.xpose.msra.mxu0 0.0
        %459 = vmatprep.subr.mxu0 0.0
        %460 = vmatpush1.xpose.msra.mxu0 0.0
        %461 = vmatprep.subr.mxu0 0.0
        %462 = vmatpush1.xpose.msra.mxu0 0.0
        %463 = vmatprep.subr.mxu0 0.0
        %464 = vmatpush1.xpose.msra.mxu0 0.0
        %465 = vmatprep.subr.mxu0 0.0
        %466 = vmatpush1.xpose.msra.mxu0 0.0
        %467 = vmatprep.subr.mxu0 0.0
        %468 = vmatpush1.xpose.msra.mxu0 0.0
        %469 = vmatprep.subr.mxu0 0.0
        %470 = vmatpush1.xpose.msra.mxu0 0.0
        %471 = vmatprep.mubr.f32.mxu0 0.0
        %472 = vmatmul.mubr.f32.gmra.mrb[0].mxu0 %v399
        %v473 = vpop.f32.mrb[0].mxu0
        %v474 = vadd.f32 %v396, %v473
        %v475 = vpop.f32.mrb[0].mxu0
        %476 = vdwg.mxu0
        %v477 = vlaneseq
        %v478 = vand.u32 %v477, 127
        %479 = vset.pattern.permute.xlu0 0
        %480 = vperm.xlu0 %479, %v384
        %v481 = vpop.permute.xlu0 %480
        %vm482 = vcmp.ge.s32.totalorder %v478, %v481
        %483 = vset.pattern.permute.xlu0 0
        %484 = vperm.xlu0 %483, %v385
        %v485 = vpop.permute.xlu0 %484
        %vm486 = vcmp.le.s32.totalorder %v478, %v485
        %vm487 = vmand %vm482, %vm486
        %v488 = vlaneseq
        %v489 = vshrl.u32 %v488, 7
        %v490 = vsub.s32 0, %v489
        %v491 = vrot.slane %v474, %v490
        %v492 = vsel %vm487, %v491, -1e+30
        %vm493 = vcmask 130048
        %v494 = vsel %vm493, %v492, -inf
        %495 = vmax.xlane.f32.xlu0 %v494
        %v496 = vpop.xlane.xlu0 %495
        %v497 = vsub.f32 %v492, %v496
        %v498 = vmul.f32 %v497, 1.442695
        %v499 = vpow.pop %v498
        %v500 = vsel %vm487, %v499, 0.0
        %v501 = vsel %vm493, %v500, 0.0
        %502 = vadd.xlane.f32.xlu0 %v501
        %v503 = vpop.xlane.xlu0 %502
        %v504 = vrcp.pop %v503
        %v505 = vmul.f32 %v500, %v504
        %v507 = vsel %vm493, %v505, 0
        %509 = vmatprep.subr.mxu0 0.0
        %510 = vmatpush1.msra.mxu0 %v382
        %511 = vmatprep.subr.mxu0 0.0
        %512 = vmatpush1.msra.mxu0 %v383
        %513 = vmatprep.subr.mxu0 0.0
        %514 = vmatpush1.msra.mxu0 0.0
        %515 = vmatprep.subr.mxu0 0.0
        %516 = vmatpush1.msra.mxu0 0.0
        %517 = vmatprep.subr.mxu0 0.0
        %518 = vmatpush1.msra.mxu0 0.0
        %519 = vmatprep.subr.mxu0 0.0
        %520 = vmatpush1.msra.mxu0 0.0
        %521 = vmatprep.subr.mxu0 0.0
        %522 = vmatpush1.msra.mxu0 0.0
        %523 = vmatprep.subr.mxu0 0.0
        %524 = vmatpush1.msra.mxu0 0.0
        %525 = vmatprep.subr.mxu0 0.0
        %526 = vmatpush1.msra.mxu0 0.0
        %527 = vmatprep.subr.mxu0 0.0
        %528 = vmatpush1.msra.mxu0 0.0
        %529 = vmatprep.subr.mxu0 0.0
        %530 = vmatpush1.msra.mxu0 0.0
        %531 = vmatprep.subr.mxu0 0.0
        %532 = vmatpush1.msra.mxu0 0.0
        %533 = vmatprep.subr.mxu0 0.0
        %534 = vmatpush1.msra.mxu0 0.0
        %535 = vmatprep.subr.mxu0 0.0
        %536 = vmatpush1.msra.mxu0 0.0
        %537 = vmatprep.subr.mxu0 0.0
        %538 = vmatpush1.msra.mxu0 0.0
        %539 = vmatprep.subr.mxu0 0.0
        %540 = vmatpush1.msra.mxu0 0.0
        %541 = vmatprep.subr.mxu0 0.0
        %542 = vmatpush1.msra.mxu0 0.0
        %543 = vmatprep.subr.mxu0 0.0
        %544 = vmatpush1.msra.mxu0 0.0
        %545 = vmatprep.subr.mxu0 0.0
        %546 = vmatpush1.msra.mxu0 0.0
        %547 = vmatprep.subr.mxu0 0.0
        %548 = vmatpush1.msra.mxu0 0.0
        %549 = vmatprep.subr.mxu0 0.0
        %550 = vmatpush1.msra.mxu0 0.0
        %551 = vmatprep.subr.mxu0 0.0
        %552 = vmatpush1.msra.mxu0 0.0
        %553 = vmatprep.subr.mxu0 0.0
        %554 = vmatpush1.msra.mxu0 0.0
        %555 = vmatprep.subr.mxu0 0.0
        %556 = vmatpush1.msra.mxu0 0.0
        %557 = vmatprep.subr.mxu0 0.0
        %558 = vmatpush1.msra.mxu0 0.0
        %559 = vmatprep.subr.mxu0 0.0
        %560 = vmatpush1.msra.mxu0 0.0
        %561 = vmatprep.subr.mxu0 0.0
        %562 = vmatpush1.msra.mxu0 0.0
        %563 = vmatprep.subr.mxu0 0.0
        %564 = vmatpush1.msra.mxu0 0.0
        %565 = vmatprep.subr.mxu0 0.0
        %566 = vmatpush1.msra.mxu0 0.0
        %567 = vmatprep.subr.mxu0 0.0
        %568 = vmatpush1.msra.mxu0 0.0
        %569 = vmatprep.subr.mxu0 0.0
        %570 = vmatpush1.msra.mxu0 0.0
        %571 = vmatprep.subr.mxu0 0.0
        %572 = vmatpush1.msra.mxu0 0.0
        %573 = vmatprep.mubr.f32.mxu0 0.0
        %574 = vmatmul.mubr.f32.gmra.mrb[0].mxu0 %v507
        %v575 = vpop.f32.mrb[0].mxu0
        %v576 = vadd.f32 0.0, %v575
        %v577 = vpop.f32.mrb[0].mxu0
        %578 = vdwg.mxu0
        %v579 = vmul.f32 %v576, 0.5
        %v580 = vmul.f32 %v576, 0.70710677
        %v581 = vand.u32 2147483647, %v580
        %v582 = vmul.f32 %v581, 0.3275911
        %v583 = vadd.f32 %v582, 1.0
        %v584 = vrcp.pop %v583
        %v585 = vmul.f32 1.0, %v584
        %v586 = vmul.f32 %v585, 1.0614054
        %v587 = vadd.f32 %v586, -1.4531521
        %v588 = vmul.f32 %v587, %v585
        %v589 = vadd.f32 %v588, 1.4214138
        %v590 = vmul.f32 %v589, %v585
        %v591 = vadd.f32 %v590, -0.28449672
        %v592 = vmul.f32 %v591, %v585
        %v593 = vadd.f32 %v592, 0.2548296
        %v594 = vmul.f32 %v593, %v585
        %v595 = vmul.f32 %v581, %v581
        %v596 = vsub.f32 0.0, %v595
        %v597 = vmul.f32 %v596, 1.442695
        %v598 = vpow.pop %v597
        %v599 = vmul.f32 %v594, %v598
        %v600 = vsub.f32 1.0, %v599
        %vm601 = vcmp.ge.f32.partialorder %v580, 0.0
        %v602 = vsub.f32 0.0, %v600
        %v603 = vsel %vm601, %v600, %v602
        %v604 = vadd.f32 %v603, 1.0
        %v605 = vmul.f32 %v579, %v604
        %v606 = vld [vmem:[#allocation3] sm:$0xff]
        %v607 = vld [vmem:[#allocation3 + $0x8] sm:$0xff]
        %v608 = vld [vmem:[#allocation3 + $0x10] sm:$0xff]
        %v609 = vld [vmem:[#allocation3 + $0x18] sm:$0xff]
        %v610 = vld [vmem:[#allocation3 + $0x20] sm:$0xff]
        %v611 = vld [vmem:[#allocation3 + $0x28] sm:$0xff]
        %v612 = vld [vmem:[#allocation3 + $0x30] sm:$0xff]
        %v613 = vld [vmem:[#allocation3 + $0x38] sm:$0xff]
        %v614 = vld [vmem:[%s6] sm:$0x1]
        %v616 = vlaneseq
        %v617 = vshrl.u32 %v616, 7
        %v618 = vsub.s32 0, %v617
        %v619 = vrot.slane %v614, %v618
        %v622 = vsel %vm397, %v605, 0
        %624 = vmatprep.subr.mxu0 0.0
        %625 = vmatpush1.msra.mxu0 %v606
        %626 = vmatprep.subr.mxu0 0.0
        %627 = vmatpush1.msra.mxu0 %v607
        %628 = vmatprep.subr.mxu0 0.0
        %629 = vmatpush1.msra.mxu0 %v608
        %630 = vmatprep.subr.mxu0 0.0
        %631 = vmatpush1.msra.mxu0 %v609
        %632 = vmatprep.subr.mxu0 0.0
        %633 = vmatpush1.msra.mxu0 %v610
        %634 = vmatprep.subr.mxu0 0.0
        %635 = vmatpush1.msra.mxu0 %v611
        %636 = vmatprep.subr.mxu0 0.0
        %637 = vmatpush1.msra.mxu0 %v612
        %638 = vmatprep.subr.mxu0 0.0
        %639 = vmatpush1.msra.mxu0 %v613
        %640 = vmatprep.subr.mxu0 0.0
        %641 = vmatpush1.msra.mxu0 0.0
        %642 = vmatprep.subr.mxu0 0.0
        %643 = vmatpush1.msra.mxu0 0.0
        %644 = vmatprep.subr.mxu0 0.0
        %645 = vmatpush1.msra.mxu0 0.0
        %646 = vmatprep.subr.mxu0 0.0
        %647 = vmatpush1.msra.mxu0 0.0
        %648 = vmatprep.subr.mxu0 0.0
        %649 = vmatpush1.msra.mxu0 0.0
        %650 = vmatprep.subr.mxu0 0.0
        %651 = vmatpush1.msra.mxu0 0.0
        %652 = vmatprep.subr.mxu0 0.0
        %653 = vmatpush1.msra.mxu0 0.0
        %654 = vmatprep.subr.mxu0 0.0
        %655 = vmatpush1.msra.mxu0 0.0
        %656 = vmatprep.subr.mxu0 0.0
        %657 = vmatpush1.msra.mxu0 0.0
        %658 = vmatprep.subr.mxu0 0.0
        %659 = vmatpush1.msra.mxu0 0.0
        %660 = vmatprep.subr.mxu0 0.0
        %661 = vmatpush1.msra.mxu0 0.0
        %662 = vmatprep.subr.mxu0 0.0
        %663 = vmatpush1.msra.mxu0 0.0
        %664 = vmatprep.subr.mxu0 0.0
        %665 = vmatpush1.msra.mxu0 0.0
        %666 = vmatprep.subr.mxu0 0.0
        %667 = vmatpush1.msra.mxu0 0.0
        %668 = vmatprep.subr.mxu0 0.0
        %669 = vmatpush1.msra.mxu0 0.0
        %670 = vmatprep.subr.mxu0 0.0
        %671 = vmatpush1.msra.mxu0 0.0
        %672 = vmatprep.subr.mxu0 0.0
        %673 = vmatpush1.msra.mxu0 0.0
        %674 = vmatprep.subr.mxu0 0.0
        %675 = vmatpush1.msra.mxu0 0.0
        %676 = vmatprep.subr.mxu0 0.0
        %677 = vmatpush1.msra.mxu0 0.0
        %678 = vmatprep.subr.mxu0 0.0
        %679 = vmatpush1.msra.mxu0 0.0
        %680 = vmatprep.subr.mxu0 0.0
        %681 = vmatpush1.msra.mxu0 0.0
        %682 = vmatprep.subr.mxu0 0.0
        %683 = vmatpush1.msra.mxu0 0.0
        %684 = vmatprep.subr.mxu0 0.0
        %685 = vmatpush1.msra.mxu0 0.0
        %686 = vmatprep.subr.mxu0 0.0
        %687 = vmatpush1.msra.mxu0 0.0
        %688 = vmatprep.mubr.f32.mxu0 0.0
        %689 = vmatmul.mubr.f32.gmra.mrb[0].mxu0 %v622
        %v690 = vpop.f32.mrb[0].mxu0
        %v691 = vadd.f32 %v619, %v690
        %v692 = vpop.f32.mrb[0].mxu0
        %693 = vdwg.mxu0
        %694 = vadd.xlane.f32.xlu0 %v691
        %v695 = vpop.xlane.xlu0 %694
        %v696 = vrcp.pop 128.0
        %v697 = vmul.f32 %v695, %v696
        %v698 = vsub.f32 %v691, %v697
        %v699 = vmul.f32 %v698, %v698
        %700 = vadd.xlane.f32.xlu0 %v699
        %v701 = vpop.xlane.xlu0 %700
        %v702 = vmul.f32 %v701, %v696
        %v703 = vadd.f32 %v702, 1e-12
        %v704 = vrsqrt.pop %v703
        %v705 = vmul.f32 %v698, %v704
        %v706 = vld [vmem:[%s7] sm:$0x1]
        %v708 = vlaneseq
        %v709 = vshrl.u32 %v708, 7
        %v710 = vsub.s32 0, %v709
        %v711 = vrot.slane %v706, %v710
        %v713 = vmul.f32 %v705, %v711
        %v714 = vld [vmem:[%s8] sm:$0x1]
        %v716 = vlaneseq
        %v717 = vshrl.u32 %v716, 7
        %v718 = vsub.s32 0, %v717
        %v719 = vrot.slane %v714, %v718
        %v721 = vadd.f32 %v713, %v719
        %722 = vst [vmem:[%s368] sm:$0xff] %v721
        %s723 = sand.u32 %s238, 1
        %s724 = scalar_lea.sflag [#allocation5], %s723
        %s725 = sand.u32 %s238, 1
        %s726 = smul.addr %s725, 8
        %s727 = scalar_lea.vmem [#allocation6], %s726
        // Predicated region
        $region61: #{tpu_custom_call.1} parent=55 // pred_check
          %p728 = pneg %p248
        $region62: #{tpu_custom_call.1} parent=55 // pred_check_branch
          %730 = sbr.rel (%p728) target = $region64
        $region63: #{tpu_custom_call.1} parent=55 // pred_region
          %s732 = ssub.s32 128, 128
          %733 = vsyncadd %s724, %s732
          %s734 = smul.addr %s26, 128
          %s735 = scalar_lea.hbm %s9, %s734
          %s737 = sshll.u32 %s727, 4
          %s738 = int_to_ptr.vmem [resolvable:$true] %s737
          %740 = dma.vmem_to_hbm [thread:$0]  %s738, 128, %s735, %s724
        $region64: #{tpu_custom_call.1} parent=55 // pred_fallthru
          _
      $region56: #{tpu_custom_call.1} parent=5 // pred_fallthru
        _
      %p741 = scmp.le.s32.totalorder 2, %s21
      // Predicated region
      $region65: #{tpu_custom_call.1} parent=5 // pred_check
        %p742 = pneg %p741
      $region66: #{tpu_custom_call.1} parent=5 // pred_check_branch
        %744 = sbr.rel (%p742) target = $region68
      $region67: #{tpu_custom_call.1} parent=5 // pred_region
        %s745 = ssub.s32 %s21, 2
        // Predicated region
        $region69: #{tpu_custom_call.1} parent=67 // pred_check
          %p746 = pneg %p254
        $region70: #{tpu_custom_call.1} parent=67 // pred_check_branch
          %748 = sbr.rel (%p746) target = $region72
        $region71: #{tpu_custom_call.1} parent=67 // pred_region
          %s749 = sand.u32 %s239, 1
          %s750 = scalar_lea.sflag [#allocation5], %s749
          %s751 = sand.u32 %s239, 1
          %s752 = smul.addr %s751, 8
          %s753 = scalar_lea.vmem [#allocation6], %s752
          %754 = dma.done %s750, 128
        $region72: #{tpu_custom_call.1} parent=67 // pred_fallthru
          _
      $region68: #{tpu_custom_call.1} parent=5 // pred_fallthru
        _
    $region6: #{tpu_custom_call.1} parent=1 // loop_footer
      %s25 = sadd.s32 1, %s21
    $region7: #{tpu_custom_call.1} parent=1 // loop_footer_branch
      %20 = sbr.rel target = $region3
    $region8: #{tpu_custom_call.1} parent=1 // loop_exit
      _
    %755 = vsyncpa [#allocation4], 1
    %s756 = scalar_lea.sflag [#allocation4], 1
    %757 = vsyncpa %s756, 1
    %758 = vsyncpa [#allocation5], 1
    %s759 = scalar_lea.sflag [#allocation5], 1
    %760 = vsyncpa %s759, 1

</llo_original>
